<compile_context>
chip_gen: v7x
topology: tpu7x:2x2x1
jax: 0.10.0
libtpu: 0.0.40
codegen_flags: <defaults>
</compile_context>

<pallas_src>
import math

import jax
import jax.numpy as jnp
from jax.experimental import pallas as pl
from jax.experimental.pallas import tpu as pltpu

IN_DIM = 2
HID = 50
OUT_DIM = 4
DEFAULT_BLOCK_BATCH = 1024           # lanes per grid step (kept a multiple of 128)
VMEM_LIMIT_BYTES = 32 * 1024 * 1024  # explicit; safe headroom on v7x (64 MiB phys)


def _round_up(x, m):
    return (x + m - 1) // m * m


def _generator_kernel(x_ref,
                      w1t_ref, b1_ref,
                      w2t_ref, b2_ref,
                      w3t_ref, b3_ref,
                      w4t_ref, b4_ref,
                      w5t_ref, b5_ref,
                      o_ref):
    """Feature-major MLP step.

    x_ref  : (2, TB)   f32   batch on the lane axis
    wNt    : (out, in)       pre-transposed weights (W^T)
    bN     : (out, 1)  f32   feature-major biases
    o_ref  : (4, TB)   f32   lane-dense output block
    """
    x = x_ref[...]                                     # (2, TB)
    w1t = w1t_ref[...]                                 # (50, 2) f32

    # ---- layer 1: K=2 contraction as two VPU broadcast FMAs (skip the MXU).
    h = jnp.tanh(w1t[:, 0:1] * x[0:1, :]
                 + w1t[:, 1:2] * x[1:2, :]
                 + b1_ref[...])                        # (50, TB) f32

    # ---- layers 2..5 on the MXU, f32 accumulation via preferred_element_type.
    def dense(w_ref, b_ref, h):
        return jnp.dot(w_ref[...], h.astype(w_ref.dtype),
                       preferred_element_type=jnp.float32) + b_ref[...]

    h = jnp.tanh(dense(w2t_ref, b2_ref, h))            # (50, TB)
    h = jnp.tanh(dense(w3t_ref, b3_ref, h))            # (50, TB)
    h = jnp.tanh(dense(w4t_ref, b4_ref, h))            # (50, TB)
    r = dense(w5t_ref, b5_ref, h)                      # (4, TB) f32

    # ---- per-row post-process on lane-dense slices (row 2 passes through).
    o_ref[0:2, :] = jnp.exp(r[0:2, :])                       # rows 0, 1 -> exp
    o_ref[2:3, :] = r[2:3, :]                                # row 2 -> identity
    o_ref[3:4, :] = jnp.tanh(r[3:4, :]) * (math.pi / 2.0)    # row 3 -> tanh * pi/2


def generator_forward(a, params, *, block_batch=DEFAULT_BLOCK_BATCH,
                      hidden_matmul_dtype=jnp.bfloat16,
                      transposed_output=False):
    """Forward pass of the Generator.

    a: tuple of (N, k_i) (or (N,)) arrays whose widths sum to 2 (torch.cat dim=1).
    Returns (N, 4) float32; with transposed_output=True returns the raw
    feature-major (4, N) slab (skips the wrapper-side transpose copy).
    """
    cols = []
    for arr in a:
        arr = jnp.asarray(arr, jnp.float32)
        if arr.ndim == 1:
            arr = arr[:, None]
        cols.append(arr)
    x = jnp.concatenate(cols, axis=1)                  # (N, 2)
    n, in_dim = x.shape
    assert in_dim == IN_DIM, "input widths must sum to 2"

    (w1, b1), (w2, b2), (w3, b3), (w4, b4), (w5, b5) = params
    # Pre-transposed weights (W^T) and feature-major (features, 1) biases.
    w1t = jnp.asarray(w1, jnp.float32).T                                # layer 1: VPU, f32
    w2t, w3t, w4t = (jnp.asarray(w, hidden_matmul_dtype).T for w in (w2, w3, w4))
    w5t = jnp.asarray(w5, jnp.float32).T                                # feeds exp: keep f32
    b1c, b2c, b3c, b4c, b5c = (jnp.asarray(b, jnp.float32).reshape(-1, 1)
                               for b in (b1, b2, b3, b4, b5))

    # Batch tiling: lane-dense tile (multiple of 128).  Keep >= 2 grid steps
    # whenever the batch allows it so v7x can shard the parallel axis over 2 TCs.
    block_batch = max(128, _round_up(block_batch, 128))
    tb = min(block_batch, max(128, _round_up(pl.cdiv(n, 2), 128)))
    n_pad = _round_up(n, tb)

    # Single lane-dense (2, n_pad) input slab (transpose + zero-pad fuse in XLA).
    xt = x.T
    if n_pad != n:
        xt = jnp.pad(xt, ((0, 0), (0, n_pad - n)))

    # Constant index_map => weights/biases are DMA'd to VMEM once, reused per step.
    full = lambda shape: pl.BlockSpec(shape, lambda i: (0, 0))

    out_fm = pl.pallas_call(
        _generator_kernel,
        out_shape=jax.ShapeDtypeStruct((OUT_DIM, n_pad), jnp.float32),
        grid_spec=pltpu.PrefetchScalarGridSpec(
            num_scalar_prefetch=0,
            grid=(n_pad // tb,),
            in_specs=[
                pl.BlockSpec((IN_DIM, tb), lambda i: (0, i)),    # x, feature-major
                full((HID, IN_DIM)),   full((HID, 1)),           # layer 1
                full((HID, HID)),      full((HID, 1)),           # layer 2
                full((HID, HID)),      full((HID, 1)),           # layer 3
                full((HID, HID)),      full((HID, 1)),           # layer 4
                full((OUT_DIM, HID)),  full((OUT_DIM, 1)),       # layer 5
            ],
            out_specs=pl.BlockSpec((OUT_DIM, tb), lambda i: (0, i)),
        ),
        compiler_params=pltpu.CompilerParams(
            dimension_semantics=("parallel",),
            vmem_limit_bytes=VMEM_LIMIT_BYTES),
    )(xt, w1t, b1c, w2t, b2c, w3t, b3c, w4t, b4c, w5t, b5c)

    if transposed_output:
        return out_fm[:, :n]
    return out_fm[:, :n].T        # (N, 4), matching the PyTorch module's layout


def generator_reference(a, params):
    """Pure-JAX f32 reference for validation."""
    x = jnp.concatenate([jnp.asarray(arr, jnp.float32).reshape(arr.shape[0], -1)
                         for arr in a], axis=1)
    (w1, b1), (w2, b2), (w3, b3), (w4, b4), (w5, b5) = params
    hp = jax.lax.Precision.HIGHEST
    h = jnp.tanh(jnp.dot(x, w1, precision=hp) + b1)
    h = jnp.tanh(jnp.dot(h, w2, precision=hp) + b2)
    h = jnp.tanh(jnp.dot(h, w3, precision=hp) + b3)
    h = jnp.tanh(jnp.dot(h, w4, precision=hp) + b4)
    r = jnp.dot(h, w5, precision=hp) + b5
    r = r.at[:, 0].set(jnp.exp(r[:, 0]))
    r = r.at[:, 1].set(jnp.exp(r[:, 1]))
    r = r.at[:, 3].set(jnp.tanh(r[:, 3]) * (math.pi / 2.0))
    return r


def init_params(key):
    """Deterministic init mimicking torch.nn.Linear (uniform +-1/sqrt(fan_in)).

    Weights stored as (fan_in, fan_out); biases as (fan_out,).
    """
    dims = [(IN_DIM, HID), (HID, HID), (HID, HID), (HID, HID), (HID, OUT_DIM)]
    params = []
    for (fan_in, fan_out) in dims:
        key, kw, kb = jax.random.split(key, 3)
        bound = 1.0 / math.sqrt(fan_in)
        w = jax.random.uniform(kw, (fan_in, fan_out), jnp.float32, -bound, bound)
        b = jax.random.uniform(kb, (fan_out,), jnp.float32, -bound, bound)
        params.append((w, b))
    return params


def _check(out, ref, *, rtol, atol):
    assert out.shape == ref.shape
    assert bool(jnp.all(jnp.isfinite(out)))
    assert bool(jnp.all(out[:, 0] > 0)) and bool(jnp.all(out[:, 1] > 0))
    assert bool(jnp.all(jnp.abs(out[:, 3]) <= math.pi / 2))
    assert bool(jnp.allclose(out, ref, rtol=rtol, atol=atol)), (
        f"max abs err {float(jnp.max(jnp.abs(out - ref)))}")


if __name__ == "__main__":
    key = jax.random.PRNGKey(0)
    k_in, k_param = jax.random.split(key)
    params = init_params(k_param)

    # --- small demo: PyTorch forward takes a tuple `a`, cat'ed into (N, 2).
    N = 64
    kx, kt = jax.random.split(k_in)
    a = (jax.random.normal(kx, (N, 1), jnp.float32),
         jax.random.normal(kt, (N, 1), jnp.float32))
    ref = generator_reference(a, params)

    # f32 matmul path (tighter tolerance).
    out_f32 = jax.block_until_ready(
        generator_forward(a, params, hidden_matmul_dtype=jnp.float32))
    _check(out_f32, ref, rtol=1e-2, atol=1e-2)

    # default path: bf16 hidden matmuls (f32 accumulation, f32 last layer).
    out = jax.block_until_ready(generator_forward(a, params))
    _check(out, ref, rtol=5e-2, atol=5e-2)

    # --- non-multiple batch -> padding + >= 2-step grid (exercises pipelining
    #     and the v7x 2-TC "parallel" sharding path).
    N2 = 200
    kx2, kt2 = jax.random.split(kt)
    a2 = (jax.random.normal(kx2, (N2, 1), jnp.float32),
          jax.random.normal(kt2, (N2, 1), jnp.float32))
    out2 = jax.block_until_ready(
        generator_forward(a2, params, hidden_matmul_dtype=jnp.float32))
    _check(out2, generator_reference(a2, params), rtol=1e-2, atol=1e-2)

    print("KERNEL_OK")
</pallas_src>

<mosaic_0001>
module attributes {stable_mosaic.version = 11 : i64} {
  func.func @_generator_kernel(%arg0: i32, %arg1: memref<2x128xf32, #tpu.memory_space<vmem>>, %arg2: memref<50x2xf32, #tpu.memory_space<vmem>>, %arg3: memref<50x1xf32, #tpu.memory_space<vmem>>, %arg4: memref<50x50xf32, #tpu.memory_space<vmem>>, %arg5: memref<50x1xf32, #tpu.memory_space<vmem>>, %arg6: memref<50x50xf32, #tpu.memory_space<vmem>>, %arg7: memref<50x1xf32, #tpu.memory_space<vmem>>, %arg8: memref<50x50xf32, #tpu.memory_space<vmem>>, %arg9: memref<50x1xf32, #tpu.memory_space<vmem>>, %arg10: memref<4x50xf32, #tpu.memory_space<vmem>>, %arg11: memref<4x1xf32, #tpu.memory_space<vmem>>, %arg12: memref<4x128xf32, #tpu.memory_space<vmem>>) attributes {dimension_semantics = [#tpu.dimension_semantics<parallel>], iteration_bounds = array<i64: 1>, scalar_prefetch = 0 : i64, scratch_operands = 0 : i64, tpu.core_type = #tpu.core_type<tc>, window_params = [{transform_indices = @transform_0, window_bounds = array<i64: 2, 128>}, {pipeline_mode = #tpu.pipeline_mode<synchronous>, transform_indices = @transform_1, window_bounds = array<i64: 50, 2>}, {pipeline_mode = #tpu.pipeline_mode<synchronous>, transform_indices = @transform_2, window_bounds = array<i64: 50, 1>}, {pipeline_mode = #tpu.pipeline_mode<synchronous>, transform_indices = @transform_3, window_bounds = array<i64: 50, 50>}, {pipeline_mode = #tpu.pipeline_mode<synchronous>, transform_indices = @transform_4, window_bounds = array<i64: 50, 1>}, {pipeline_mode = #tpu.pipeline_mode<synchronous>, transform_indices = @transform_5, window_bounds = array<i64: 50, 50>}, {pipeline_mode = #tpu.pipeline_mode<synchronous>, transform_indices = @transform_6, window_bounds = array<i64: 50, 1>}, {pipeline_mode = #tpu.pipeline_mode<synchronous>, transform_indices = @transform_7, window_bounds = array<i64: 50, 50>}, {pipeline_mode = #tpu.pipeline_mode<synchronous>, transform_indices = @transform_8, window_bounds = array<i64: 50, 1>}, {pipeline_mode = #tpu.pipeline_mode<synchronous>, transform_indices = @transform_9, window_bounds = array<i64: 4, 50>}, {pipeline_mode = #tpu.pipeline_mode<synchronous>, transform_indices = @transform_10, window_bounds = array<i64: 4, 1>}, {transform_indices = @transform_11, window_bounds = array<i64: 4, 128>}]} {
    %c0 = arith.constant 0 : index
    %c0_0 = arith.constant 0 : index
    %0 = vector.load %arg1[%c0, %c0_0] : memref<2x128xf32, #tpu.memory_space<vmem>>, vector<2x128xf32>
    %c0_1 = arith.constant 0 : index
    %c0_2 = arith.constant 0 : index
    %1 = vector.load %arg2[%c0_1, %c0_2] : memref<50x2xf32, #tpu.memory_space<vmem>>, vector<50x2xf32>
    %2 = vector.extract_strided_slice %1 {offsets = [0, 0], sizes = [50, 1], strides = [1, 1]} : vector<50x2xf32> to vector<50x1xf32>
    %3 = vector.extract_strided_slice %0 {offsets = [0, 0], sizes = [1, 128], strides = [1, 1]} : vector<2x128xf32> to vector<1x128xf32>
    %4 = vector.broadcast %2 : vector<50x1xf32> to vector<50x128xf32>
    %5 = vector.broadcast %3 : vector<1x128xf32> to vector<50x128xf32>
    %6 = arith.mulf %4, %5 : vector<50x128xf32>
    %7 = vector.extract_strided_slice %1 {offsets = [0, 1], sizes = [50, 1], strides = [1, 1]} : vector<50x2xf32> to vector<50x1xf32>
    %8 = vector.extract_strided_slice %0 {offsets = [1, 0], sizes = [1, 128], strides = [1, 1]} : vector<2x128xf32> to vector<1x128xf32>
    %9 = vector.broadcast %7 : vector<50x1xf32> to vector<50x128xf32>
    %10 = vector.broadcast %8 : vector<1x128xf32> to vector<50x128xf32>
    %11 = arith.mulf %9, %10 : vector<50x128xf32>
    %12 = arith.addf %6, %11 : vector<50x128xf32>
    %c0_3 = arith.constant 0 : index
    %c0_4 = arith.constant 0 : index
    %13 = vector.load %arg3[%c0_3, %c0_4] : memref<50x1xf32, #tpu.memory_space<vmem>>, vector<50x1xf32>
    %14 = vector.broadcast %13 : vector<50x1xf32> to vector<50x128xf32>
    %15 = arith.addf %12, %14 : vector<50x128xf32>
    %16 = math.tanh %15 : vector<50x128xf32>
    %c0_5 = arith.constant 0 : index
    %c0_6 = arith.constant 0 : index
    %17 = vector.load %arg4[%c0_5, %c0_6] : memref<50x50xf32, #tpu.memory_space<vmem>>, vector<50x50xf32>
    %cst = arith.constant dense<0.000000e+00> : vector<50x128xf32>
    %18 = tpu.matmul %17, %16, %cst {dimension_numbers = #tpu.dot_dimension_numbers<[1], [0], [0], [1], [0, 0, 1, 1], [], []>} : vector<50x50xf32>, vector<50x128xf32>, vector<50x128xf32> -> vector<50x128xf32>
    %c0_7 = arith.constant 0 : index
    %c0_8 = arith.constant 0 : index
    %19 = vector.load %arg5[%c0_7, %c0_8] : memref<50x1xf32, #tpu.memory_space<vmem>>, vector<50x1xf32>
    %20 = vector.broadcast %19 : vector<50x1xf32> to vector<50x128xf32>
    %21 = arith.addf %18, %20 : vector<50x128xf32>
    %22 = math.tanh %21 : vector<50x128xf32>
    %c0_9 = arith.constant 0 : index
    %c0_10 = arith.constant 0 : index
    %23 = vector.load %arg6[%c0_9, %c0_10] : memref<50x50xf32, #tpu.memory_space<vmem>>, vector<50x50xf32>
    %cst_11 = arith.constant dense<0.000000e+00> : vector<50x128xf32>
    %24 = tpu.matmul %23, %22, %cst_11 {dimension_numbers = #tpu.dot_dimension_numbers<[1], [0], [0], [1], [0, 0, 1, 1], [], []>} : vector<50x50xf32>, vector<50x128xf32>, vector<50x128xf32> -> vector<50x128xf32>
    %c0_12 = arith.constant 0 : index
    %c0_13 = arith.constant 0 : index
    %25 = vector.load %arg7[%c0_12, %c0_13] : memref<50x1xf32, #tpu.memory_space<vmem>>, vector<50x1xf32>
    %26 = vector.broadcast %25 : vector<50x1xf32> to vector<50x128xf32>
    %27 = arith.addf %24, %26 : vector<50x128xf32>
    %28 = math.tanh %27 : vector<50x128xf32>
    %c0_14 = arith.constant 0 : index
    %c0_15 = arith.constant 0 : index
    %29 = vector.load %arg8[%c0_14, %c0_15] : memref<50x50xf32, #tpu.memory_space<vmem>>, vector<50x50xf32>
    %cst_16 = arith.constant dense<0.000000e+00> : vector<50x128xf32>
    %30 = tpu.matmul %29, %28, %cst_16 {dimension_numbers = #tpu.dot_dimension_numbers<[1], [0], [0], [1], [0, 0, 1, 1], [], []>} : vector<50x50xf32>, vector<50x128xf32>, vector<50x128xf32> -> vector<50x128xf32>
    %c0_17 = arith.constant 0 : index
    %c0_18 = arith.constant 0 : index
    %31 = vector.load %arg9[%c0_17, %c0_18] : memref<50x1xf32, #tpu.memory_space<vmem>>, vector<50x1xf32>
    %32 = vector.broadcast %31 : vector<50x1xf32> to vector<50x128xf32>
    %33 = arith.addf %30, %32 : vector<50x128xf32>
    %34 = math.tanh %33 : vector<50x128xf32>
    %c0_19 = arith.constant 0 : index
    %c0_20 = arith.constant 0 : index
    %35 = vector.load %arg10[%c0_19, %c0_20] : memref<4x50xf32, #tpu.memory_space<vmem>>, vector<4x50xf32>
    %cst_21 = arith.constant dense<0.000000e+00> : vector<4x128xf32>
    %36 = tpu.matmul %35, %34, %cst_21 {dimension_numbers = #tpu.dot_dimension_numbers<[1], [0], [0], [1], [0, 0, 1, 1], [], []>} : vector<4x50xf32>, vector<50x128xf32>, vector<4x128xf32> -> vector<4x128xf32>
    %c0_22 = arith.constant 0 : index
    %c0_23 = arith.constant 0 : index
    %37 = vector.load %arg11[%c0_22, %c0_23] : memref<4x1xf32, #tpu.memory_space<vmem>>, vector<4x1xf32>
    %38 = vector.broadcast %37 : vector<4x1xf32> to vector<4x128xf32>
    %39 = arith.addf %36, %38 : vector<4x128xf32>
    %40 = vector.extract_strided_slice %39 {offsets = [0, 0], sizes = [2, 128], strides = [1, 1]} : vector<4x128xf32> to vector<2x128xf32>
    %41 = math.exp %40 : vector<2x128xf32>
    %c0_24 = arith.constant 0 : index
    %c0_25 = arith.constant 0 : index
    %42 = vector.load %arg12[%c0_24, %c0_25] : memref<4x128xf32, #tpu.memory_space<vmem>>, vector<2x128xf32>
    tpu.vector_store %arg12[%c0_24, %c0_25], %41 {strides = array<i32>} : memref<4x128xf32, #tpu.memory_space<vmem>>, vector<2x128xf32>,
    %43 = vector.extract_strided_slice %39 {offsets = [2, 0], sizes = [1, 128], strides = [1, 1]} : vector<4x128xf32> to vector<1x128xf32>
    %c2 = arith.constant 2 : index
    %c0_26 = arith.constant 0 : index
    %44 = vector.load %arg12[%c2, %c0_26] : memref<4x128xf32, #tpu.memory_space<vmem>>, vector<1x128xf32>
    tpu.vector_store %arg12[%c2, %c0_26], %43 {strides = array<i32>} : memref<4x128xf32, #tpu.memory_space<vmem>>, vector<1x128xf32>,
    %45 = vector.extract_strided_slice %39 {offsets = [3, 0], sizes = [1, 128], strides = [1, 1]} : vector<4x128xf32> to vector<1x128xf32>
    %46 = math.tanh %45 : vector<1x128xf32>
    %cst_27 = arith.constant 1.57079637 : f32
    %47 = vector.broadcast %cst_27 : f32 to vector<1x128xf32>
    %48 = arith.mulf %46, %47 : vector<1x128xf32>
    %c3 = arith.constant 3 : index
    %c0_28 = arith.constant 0 : index
    %49 = vector.load %arg12[%c3, %c0_28] : memref<4x128xf32, #tpu.memory_space<vmem>>, vector<1x128xf32>
    tpu.vector_store %arg12[%c3, %c0_28], %48 {strides = array<i32>} : memref<4x128xf32, #tpu.memory_space<vmem>>, vector<1x128xf32>,
    return
  }
  func.func @transform_0(%arg0: i32) -> (i32, i32) {
    %c0_i32 = arith.constant 0 : i32
    %c0_i32_0 = arith.constant 0 : i32
    return %c0_i32, %arg0 : i32, i32
  }
  func.func @transform_1(%arg0: i32) -> (i32, i32) {
    %c0_i32 = arith.constant 0 : i32
    %c0_i32_0 = arith.constant 0 : i32
    %c0_i32_1 = arith.constant 0 : i32
    return %c0_i32, %c0_i32_0 : i32, i32
  }
  func.func @transform_2(%arg0: i32) -> (i32, i32) {
    %c0_i32 = arith.constant 0 : i32
    %c0_i32_0 = arith.constant 0 : i32
    %c0_i32_1 = arith.constant 0 : i32
    return %c0_i32, %c0_i32_0 : i32, i32
  }
  func.func @transform_3(%arg0: i32) -> (i32, i32) {
    %c0_i32 = arith.constant 0 : i32
    %c0_i32_0 = arith.constant 0 : i32
    %c0_i32_1 = arith.constant 0 : i32
    return %c0_i32, %c0_i32_0 : i32, i32
  }
  func.func @transform_4(%arg0: i32) -> (i32, i32) {
    %c0_i32 = arith.constant 0 : i32
    %c0_i32_0 = arith.constant 0 : i32
    %c0_i32_1 = arith.constant 0 : i32
    return %c0_i32, %c0_i32_0 : i32, i32
  }
  func.func @transform_5(%arg0: i32) -> (i32, i32) {
    %c0_i32 = arith.constant 0 : i32
    %c0_i32_0 = arith.constant 0 : i32
    %c0_i32_1 = arith.constant 0 : i32
    return %c0_i32, %c0_i32_0 : i32, i32
  }
  func.func @transform_6(%arg0: i32) -> (i32, i32) {
    %c0_i32 = arith.constant 0 : i32
    %c0_i32_0 = arith.constant 0 : i32
    %c0_i32_1 = arith.constant 0 : i32
    return %c0_i32, %c0_i32_0 : i32, i32
  }
  func.func @transform_7(%arg0: i32) -> (i32, i32) {
    %c0_i32 = arith.constant 0 : i32
    %c0_i32_0 = arith.constant 0 : i32
    %c0_i32_1 = arith.constant 0 : i32
    return %c0_i32, %c0_i32_0 : i32, i32
  }
  func.func @transform_8(%arg0: i32) -> (i32, i32) {
    %c0_i32 = arith.constant 0 : i32
    %c0_i32_0 = arith.constant 0 : i32
    %c0_i32_1 = arith.constant 0 : i32
    return %c0_i32, %c0_i32_0 : i32, i32
  }
  func.func @transform_9(%arg0: i32) -> (i32, i32) {
    %c0_i32 = arith.constant 0 : i32
    %c0_i32_0 = arith.constant 0 : i32
    %c0_i32_1 = arith.constant 0 : i32
    return %c0_i32, %c0_i32_0 : i32, i32
  }
  func.func @transform_10(%arg0: i32) -> (i32, i32) {
    %c0_i32 = arith.constant 0 : i32
    %c0_i32_0 = arith.constant 0 : i32
    %c0_i32_1 = arith.constant 0 : i32
    return %c0_i32, %c0_i32_0 : i32, i32
  }
  func.func @transform_11(%arg0: i32) -> (i32, i32) {
    %c0_i32 = arith.constant 0 : i32
    %c0_i32_0 = arith.constant 0 : i32
    return %c0_i32, %arg0 : i32, i32
  }
}

</mosaic_0001>

<llo_original>
// kernel: tpu_custom_call.1
$region0: #{tpu_custom_call.1}
  #allocation0 [shape = 'u32[]', space=smem, size = 0x4, offset = 0x4, fixed_abs, tag = 'smem constant byte address 0x4 - core index']
  #allocation1 [shape = 'u32[144,128]{1,0:T(1,128)}', space=vmem, size = 0x12000, scoped, tag = 'internal scratch']
  %s0 = inlined_call_operand.vmem [shape: f32[2,128], index: 0, kind: input, shape index: {}]
  %s1 = inlined_call_operand.vmem [shape: f32[50,2], index: 1, kind: input, shape index: {}]
  %s2 = inlined_call_operand.vmem [shape: f32[50,1], index: 2, kind: input, shape index: {}]
  %s3 = inlined_call_operand.vmem [shape: f32[50,50], index: 3, kind: input, shape index: {}]
  %s4 = inlined_call_operand.vmem [shape: f32[50,1], index: 4, kind: input, shape index: {}]
  %s5 = inlined_call_operand.vmem [shape: f32[50,50], index: 5, kind: input, shape index: {}]
  %s6 = inlined_call_operand.vmem [shape: f32[50,1], index: 6, kind: input, shape index: {}]
  %s7 = inlined_call_operand.vmem [shape: f32[50,50], index: 7, kind: input, shape index: {}]
  %s8 = inlined_call_operand.vmem [shape: f32[50,1], index: 8, kind: input, shape index: {}]
  %s9 = inlined_call_operand.vmem [shape: f32[4,50], index: 9, kind: input, shape index: {}]
  %s10 = inlined_call_operand.vmem [shape: f32[4,1], index: 10, kind: input, shape index: {}]
  %s11 = inlined_call_operand.hbm [shape: f32[4,128], index: 11, kind: output, shape index: {}]
  %s12 = sld [smem:[#allocation0]]
  $region54: #{tpu_custom_call.1} parent=0
    _
  %s14 = ssub.s32 1, %s12
  %s15 = scalar_select 0, %s14, %s12
  $region1: #{tpu_custom_call.1} parent=0
    #allocation2 [shape = 'u8[2048]{0}', space=vmem, size = 0x800, scoped, tag = 'output window, operand 0, single buffered']
    #allocation3 [shape = 's32[1]{0}', space=sflag, size = 0x4, scoped, tag = 'scoped memory for tpu_custom_call.1']
    %16 = vsyncpa [#allocation3], 0
    // Predicated region
    $region2: #{tpu_custom_call.1} parent=1 // pred_check
      _
    $region3: #{tpu_custom_call.1} parent=1 // pred_check_branch
      %18 = sbr.rel (0) target = $region5
    $region4: #{tpu_custom_call.1} parent=1 // pred_region
      _
    $region5: #{tpu_custom_call.1} parent=1 // pred_fallthru
      _
    // Predicated region
    $region6: #{tpu_custom_call.1} parent=1 // pred_check
      _
    $region7: #{tpu_custom_call.1} parent=1 // pred_check_branch
      %20 = sbr.rel (0) target = $region9
    $region8: #{tpu_custom_call.1} parent=1 // pred_region
      _
    $region9: #{tpu_custom_call.1} parent=1 // pred_fallthru
      _
    // Predicated region
    $region10: #{tpu_custom_call.1} parent=1 // pred_check
      _
    $region11: #{tpu_custom_call.1} parent=1 // pred_check_branch
      %22 = sbr.rel (0) target = $region13
    $region12: #{tpu_custom_call.1} parent=1 // pred_region
      _
    $region13: #{tpu_custom_call.1} parent=1 // pred_fallthru
      _
    // Predicated region
    $region14: #{tpu_custom_call.1} parent=1 // pred_check
      _
    $region15: #{tpu_custom_call.1} parent=1 // pred_check_branch
      %24 = sbr.rel (0) target = $region17
    $region16: #{tpu_custom_call.1} parent=1 // pred_region
      _
    $region17: #{tpu_custom_call.1} parent=1 // pred_fallthru
      _
    // Predicated region
    $region18: #{tpu_custom_call.1} parent=1 // pred_check
      _
    $region19: #{tpu_custom_call.1} parent=1 // pred_check_branch
      %26 = sbr.rel (0) target = $region21
    $region20: #{tpu_custom_call.1} parent=1 // pred_region
      _
    $region21: #{tpu_custom_call.1} parent=1 // pred_fallthru
      _
    // Predicated region
    $region22: #{tpu_custom_call.1} parent=1 // pred_check
      _
    $region23: #{tpu_custom_call.1} parent=1 // pred_check_branch
      %28 = sbr.rel (0) target = $region25
    $region24: #{tpu_custom_call.1} parent=1 // pred_region
      _
    $region25: #{tpu_custom_call.1} parent=1 // pred_fallthru
      _
    // Predicated region
    $region26: #{tpu_custom_call.1} parent=1 // pred_check
      _
    $region27: #{tpu_custom_call.1} parent=1 // pred_check_branch
      %30 = sbr.rel (0) target = $region29
    $region28: #{tpu_custom_call.1} parent=1 // pred_region
      _
    $region29: #{tpu_custom_call.1} parent=1 // pred_fallthru
      _
    // Predicated region
    $region30: #{tpu_custom_call.1} parent=1 // pred_check
      _
    $region31: #{tpu_custom_call.1} parent=1 // pred_check_branch
      %32 = sbr.rel (0) target = $region33
    $region32: #{tpu_custom_call.1} parent=1 // pred_region
      _
    $region33: #{tpu_custom_call.1} parent=1 // pred_fallthru
      _
    // Predicated region
    $region34: #{tpu_custom_call.1} parent=1 // pred_check
      _
    $region35: #{tpu_custom_call.1} parent=1 // pred_check_branch
      %34 = sbr.rel (0) target = $region37
    $region36: #{tpu_custom_call.1} parent=1 // pred_region
      _
    $region37: #{tpu_custom_call.1} parent=1 // pred_fallthru
      _
    // Predicated region
    $region38: #{tpu_custom_call.1} parent=1 // pred_check
      _
    $region39: #{tpu_custom_call.1} parent=1 // pred_check_branch
      %36 = sbr.rel (0) target = $region41
    $region40: #{tpu_custom_call.1} parent=1 // pred_region
      _
    $region41: #{tpu_custom_call.1} parent=1 // pred_fallthru
      _
    // Predicated region
    $region42: #{tpu_custom_call.1} parent=1 // pred_check
      _
    $region43: #{tpu_custom_call.1} parent=1 // pred_check_branch
      %38 = sbr.rel (0) target = $region45
    $region44: #{tpu_custom_call.1} parent=1 // pred_region
      _
    $region45: #{tpu_custom_call.1} parent=1 // pred_fallthru
      _
    %v39 = vld [vmem:[%s0] sm:$0x3]
    %v40 = vld [vmem:[%s1] sm:$0xff]
    %v41 = vld [vmem:[%s1 + $0x8] sm:$0xff]
    %v42 = vld [vmem:[%s1 + $0x10] sm:$0xff]
    %v43 = vld [vmem:[%s1 + $0x18] sm:$0xff]
    %v44 = vld [vmem:[%s1 + $0x20] sm:$0xff]
    %v45 = vld [vmem:[%s1 + $0x28] sm:$0xff]
    %v46 = vld [vmem:[%s1 + $0x30] sm:$0x3]
    %48 = vset.pattern.permute.xlu0 0
    %49 = vperm.xlu0 %48, %v40
    %v50 = vpop.permute.xlu0 %49
    %53 = vset.pattern.permute.xlu0 0
    %54 = vperm.xlu0 %53, %v41
    %v55 = vpop.permute.xlu0 %54
    %58 = vset.pattern.permute.xlu0 0
    %59 = vperm.xlu0 %58, %v42
    %v60 = vpop.permute.xlu0 %59
    %63 = vset.pattern.permute.xlu0 0
    %64 = vperm.xlu0 %63, %v43
    %v65 = vpop.permute.xlu0 %64
    %68 = vset.pattern.permute.xlu0 0
    %69 = vperm.xlu0 %68, %v44
    %v70 = vpop.permute.xlu0 %69
    %73 = vset.pattern.permute.xlu0 0
    %74 = vperm.xlu0 %73, %v45
    %v75 = vpop.permute.xlu0 %74
    %78 = vset.pattern.permute.xlu0 0
    %79 = vperm.xlu0 %78, %v46
    %v80 = vpop.permute.xlu0 %79
    %v82 = vlaneseq
    %v83 = vshrl.u32 %v82, 7
    %v84 = vsub.s32 0, %v83
    %v85 = vrot.slane %v39, %v84
    %v86 = vmul.f32 %v50, %v85
    %v87 = vmul.f32 %v55, %v85
    %v88 = vmul.f32 %v60, %v85
    %v89 = vmul.f32 %v65, %v85
    %v90 = vmul.f32 %v70, %v85
    %v91 = vmul.f32 %v75, %v85
    %v92 = vmul.f32 %v80, %v85
    %93 = vset.pattern.permute.xlu0 1
    %94 = vperm.xlu0 %93, %v40
    %v95 = vpop.permute.xlu0 %94
    %97 = vset.pattern.permute.xlu0 1
    %98 = vperm.xlu0 %97, %v41
    %v99 = vpop.permute.xlu0 %98
    %101 = vset.pattern.permute.xlu0 1
    %102 = vperm.xlu0 %101, %v42
    %v103 = vpop.permute.xlu0 %102
    %105 = vset.pattern.permute.xlu0 1
    %106 = vperm.xlu0 %105, %v43
    %v107 = vpop.permute.xlu0 %106
    %109 = vset.pattern.permute.xlu0 1
    %110 = vperm.xlu0 %109, %v44
    %v111 = vpop.permute.xlu0 %110
    %113 = vset.pattern.permute.xlu0 1
    %114 = vperm.xlu0 %113, %v45
    %v115 = vpop.permute.xlu0 %114
    %117 = vset.pattern.permute.xlu0 1
    %118 = vperm.xlu0 %117, %v46
    %v119 = vpop.permute.xlu0 %118
    %v121 = vlaneseq
    %v122 = vshrl.u32 %v121, 7
    %v123 = vsub.s32 1, %v122
    %v124 = vrot.slane %v39, %v123
    %v125 = vmul.f32 %v95, %v124
    %v126 = vmul.f32 %v99, %v124
    %v127 = vmul.f32 %v103, %v124
    %v128 = vmul.f32 %v107, %v124
    %v129 = vmul.f32 %v111, %v124
    %v130 = vmul.f32 %v115, %v124
    %v131 = vmul.f32 %v119, %v124
    %v132 = vadd.f32 %v86, %v125
    %v133 = vadd.f32 %v87, %v126
    %v134 = vadd.f32 %v88, %v127
    %v135 = vadd.f32 %v89, %v128
    %v136 = vadd.f32 %v90, %v129
    %v137 = vadd.f32 %v91, %v130
    %v138 = vadd.f32 %v92, %v131
    %v139 = vld [vmem:[%s2] sm:$0xff]
    %v140 = vld [vmem:[%s2 + $0x8] sm:$0xff]
    %v141 = vld [vmem:[%s2 + $0x10] sm:$0xff]
    %v142 = vld [vmem:[%s2 + $0x18] sm:$0xff]
    %v143 = vld [vmem:[%s2 + $0x20] sm:$0xff]
    %v144 = vld [vmem:[%s2 + $0x28] sm:$0xff]
    %v145 = vld [vmem:[%s2 + $0x30] sm:$0x3]
    %147 = vset.pattern.permute.xlu0 0
    %148 = vperm.xlu0 %147, %v139
    %v149 = vpop.permute.xlu0 %148
    %152 = vset.pattern.permute.xlu0 0
    %153 = vperm.xlu0 %152, %v140
    %v154 = vpop.permute.xlu0 %153
    %157 = vset.pattern.permute.xlu0 0
    %158 = vperm.xlu0 %157, %v141
    %v159 = vpop.permute.xlu0 %158
    %162 = vset.pattern.permute.xlu0 0
    %163 = vperm.xlu0 %162, %v142
    %v164 = vpop.permute.xlu0 %163
    %167 = vset.pattern.permute.xlu0 0
    %168 = vperm.xlu0 %167, %v143
    %v169 = vpop.permute.xlu0 %168
    %172 = vset.pattern.permute.xlu0 0
    %173 = vperm.xlu0 %172, %v144
    %v174 = vpop.permute.xlu0 %173
    %177 = vset.pattern.permute.xlu0 0
    %178 = vperm.xlu0 %177, %v145
    %v179 = vpop.permute.xlu0 %178
    %v181 = vadd.f32 %v132, %v149
    %v182 = vadd.f32 %v133, %v154
    %v183 = vadd.f32 %v134, %v159
    %v184 = vadd.f32 %v135, %v164
    %v185 = vadd.f32 %v136, %v169
    %v186 = vadd.f32 %v137, %v174
    %v187 = vadd.f32 %v138, %v179
    %v188 = vtanh.pop %v181
    %v189 = vtanh.pop %v182
    %v190 = vtanh.pop %v183
    %v191 = vtanh.pop %v184
    %v192 = vtanh.pop %v185
    %v193 = vtanh.pop %v186
    %v194 = vtanh.pop %v187
    %v195 = vld [vmem:[%s3] sm:$0xff]
    %v196 = vld [vmem:[%s3 + $0x8] sm:$0xff]
    %v197 = vld [vmem:[%s3 + $0x10] sm:$0xff]
    %v198 = vld [vmem:[%s3 + $0x18] sm:$0xff]
    %v199 = vld [vmem:[%s3 + $0x20] sm:$0xff]
    %v200 = vld [vmem:[%s3 + $0x28] sm:$0xff]
    %v201 = vld [vmem:[%s3 + $0x30] sm:$0x3]
    %v202 = vld [vmem:[%s4] sm:$0xff]
    %v203 = vld [vmem:[%s4 + $0x8] sm:$0xff]
    %v204 = vld [vmem:[%s4 + $0x10] sm:$0xff]
    %v205 = vld [vmem:[%s4 + $0x18] sm:$0xff]
    %v206 = vld [vmem:[%s4 + $0x20] sm:$0xff]
    %v207 = vld [vmem:[%s4 + $0x28] sm:$0xff]
    %v208 = vld [vmem:[%s4 + $0x30] sm:$0x3]
    %210 = vset.pattern.permute.xlu0 0
    %211 = vperm.xlu0 %210, %v202
    %v212 = vpop.permute.xlu0 %211
    %215 = vset.pattern.permute.xlu0 0
    %216 = vperm.xlu0 %215, %v203
    %v217 = vpop.permute.xlu0 %216
    %220 = vset.pattern.permute.xlu0 0
    %221 = vperm.xlu0 %220, %v204
    %v222 = vpop.permute.xlu0 %221
    %225 = vset.pattern.permute.xlu0 0
    %226 = vperm.xlu0 %225, %v205
    %v227 = vpop.permute.xlu0 %226
    %230 = vset.pattern.permute.xlu0 0
    %231 = vperm.xlu0 %230, %v206
    %v232 = vpop.permute.xlu0 %231
    %235 = vset.pattern.permute.xlu0 0
    %236 = vperm.xlu0 %235, %v207
    %v237 = vpop.permute.xlu0 %236
    %240 = vset.pattern.permute.xlu0 0
    %241 = vperm.xlu0 %240, %v208
    %v242 = vpop.permute.xlu0 %241
    %vm244 = vcmask 408576
    %v246 = vsel %vm244, %v195, 0
    %v249 = vsel %vm244, %v196, 0
    %v252 = vsel %vm244, %v197, 0
    %v255 = vsel %vm244, %v198, 0
    %v258 = vsel %vm244, %v199, 0
    %v261 = vsel %vm244, %v200, 0
    %v264 = vsel %vm244, %v201, 0
    %vm266 = vcmask 1041408
    %v268 = vsel %vm266, %v194, 0
    %270 = vmatprep.subr.mxu0 0.0
    %271 = vmatpush1.msra.mxu0 %v188
    %272 = vmatprep.subr.mxu0 0.0
    %273 = vmatpush1.msra.mxu0 %v189
    %274 = vmatprep.subr.mxu0 0.0
    %275 = vmatpush1.msra.mxu0 %v190
    %276 = vmatprep.subr.mxu0 0.0
    %277 = vmatpush1.msra.mxu0 %v191
    %278 = vmatprep.subr.mxu0 0.0
    %279 = vmatpush1.msra.mxu0 %v192
    %280 = vmatprep.subr.mxu0 0.0
    %281 = vmatpush1.msra.mxu0 %v193
    %282 = vmatprep.subr.mxu0 0.0
    %283 = vmatpush1.msra.mxu0 %v268
    %284 = vmatprep.subr.mxu0 0.0
    %285 = vmatpush1.msra.mxu0 0.0
    %286 = vmatprep.subr.mxu0 0.0
    %287 = vmatpush1.msra.mxu0 0.0
    %288 = vmatprep.subr.mxu0 0.0
    %289 = vmatpush1.msra.mxu0 0.0
    %290 = vmatprep.subr.mxu0 0.0
    %291 = vmatpush1.msra.mxu0 0.0
    %292 = vmatprep.subr.mxu0 0.0
    %293 = vmatpush1.msra.mxu0 0.0
    %294 = vmatprep.subr.mxu0 0.0
    %295 = vmatpush1.msra.mxu0 0.0
    %296 = vmatprep.subr.mxu0 0.0
    %297 = vmatpush1.msra.mxu0 0.0
    %298 = vmatprep.subr.mxu0 0.0
    %299 = vmatpush1.msra.mxu0 0.0
    %300 = vmatprep.subr.mxu0 0.0
    %301 = vmatpush1.msra.mxu0 0.0
    %302 = vmatprep.subr.mxu0 0.0
    %303 = vmatpush1.msra.mxu0 0.0
    %304 = vmatprep.subr.mxu0 0.0
    %305 = vmatpush1.msra.mxu0 0.0
    %306 = vmatprep.subr.mxu0 0.0
    %307 = vmatpush1.msra.mxu0 0.0
    %308 = vmatprep.subr.mxu0 0.0
    %309 = vmatpush1.msra.mxu0 0.0
    %310 = vmatprep.subr.mxu0 0.0
    %311 = vmatpush1.msra.mxu0 0.0
    %312 = vmatprep.subr.mxu0 0.0
    %313 = vmatpush1.msra.mxu0 0.0
    %314 = vmatprep.subr.mxu0 0.0
    %315 = vmatpush1.msra.mxu0 0.0
    %316 = vmatprep.subr.mxu0 0.0
    %317 = vmatpush1.msra.mxu0 0.0
    %318 = vmatprep.subr.mxu0 0.0
    %319 = vmatpush1.msra.mxu0 0.0
    %320 = vmatprep.subr.mxu0 0.0
    %321 = vmatpush1.msra.mxu0 0.0
    %322 = vmatprep.subr.mxu0 0.0
    %323 = vmatpush1.msra.mxu0 0.0
    %324 = vmatprep.subr.mxu0 0.0
    %325 = vmatpush1.msra.mxu0 0.0
    %326 = vmatprep.subr.mxu0 0.0
    %327 = vmatpush1.msra.mxu0 0.0
    %328 = vmatprep.subr.mxu0 0.0
    %329 = vmatpush1.msra.mxu0 0.0
    %330 = vmatprep.subr.mxu0 0.0
    %331 = vmatpush1.msra.mxu0 0.0
    %332 = vmatprep.subr.mxu0 0.0
    %333 = vmatpush1.msra.mxu0 0.0
    %334 = vmatprep.mubr.f32.mxu0 0.0
    %335 = vmatmul.mubr.f32.gmra.mrb[0].mxu0 %v246
    %v336 = vpop.f32.mrb[0].mxu0
    %v337 = vadd.f32 %v212, %v336
    %v338 = vpop.f32.mrb[0].mxu0
    %339 = vmatprep.mubr.f32.mxu0 0.0
    %340 = vmatmul.mubr.f32.gmra.mrb[0].mxu0 %v249
    %v341 = vpop.f32.mrb[0].mxu0
    %v342 = vadd.f32 %v217, %v341
    %v343 = vpop.f32.mrb[0].mxu0
    %344 = vmatprep.mubr.f32.mxu0 0.0
    %345 = vmatmul.mubr.f32.gmra.mrb[0].mxu0 %v252
    %v346 = vpop.f32.mrb[0].mxu0
    %v347 = vadd.f32 %v222, %v346
    %v348 = vpop.f32.mrb[0].mxu0
    %349 = vmatprep.mubr.f32.mxu0 0.0
    %350 = vmatmul.mubr.f32.gmra.mrb[0].mxu0 %v255
    %v351 = vpop.f32.mrb[0].mxu0
    %v352 = vadd.f32 %v227, %v351
    %v353 = vpop.f32.mrb[0].mxu0
    %354 = vmatprep.mubr.f32.mxu0 0.0
    %355 = vmatmul.mubr.f32.gmra.mrb[0].mxu0 %v258
    %v356 = vpop.f32.mrb[0].mxu0
    %v357 = vadd.f32 %v232, %v356
    %v358 = vpop.f32.mrb[0].mxu0
    %359 = vmatprep.mubr.f32.mxu0 0.0
    %360 = vmatmul.mubr.f32.gmra.mrb[0].mxu0 %v261
    %v361 = vpop.f32.mrb[0].mxu0
    %v362 = vadd.f32 %v237, %v361
    %v363 = vpop.f32.mrb[0].mxu0
    %364 = vmatprep.mubr.f32.mxu0 0.0
    %365 = vmatmul.mubr.f32.gmra.mrb[0].mxu0 %v264
    %v366 = vpop.f32.mrb[0].mxu0
    %v367 = vadd.f32 %v242, %v366
    %v368 = vpop.f32.mrb[0].mxu0
    %369 = vdwg.mxu0
    %v370 = vtanh.pop %v337
    %v371 = vtanh.pop %v342
    %v372 = vtanh.pop %v347
    %v373 = vtanh.pop %v352
    %v374 = vtanh.pop %v357
    %v375 = vtanh.pop %v362
    %v376 = vtanh.pop %v367
    %v377 = vld [vmem:[%s5] sm:$0xff]
    %v378 = vld [vmem:[%s5 + $0x8] sm:$0xff]
    %v379 = vld [vmem:[%s5 + $0x10] sm:$0xff]
    %v380 = vld [vmem:[%s5 + $0x18] sm:$0xff]
    %v381 = vld [vmem:[%s5 + $0x20] sm:$0xff]
    %v382 = vld [vmem:[%s5 + $0x28] sm:$0xff]
    %v383 = vld [vmem:[%s5 + $0x30] sm:$0x3]
    %v384 = vld [vmem:[%s6] sm:$0xff]
    %v385 = vld [vmem:[%s6 + $0x8] sm:$0xff]
    %v386 = vld [vmem:[%s6 + $0x10] sm:$0xff]
    %v387 = vld [vmem:[%s6 + $0x18] sm:$0xff]
    %v388 = vld [vmem:[%s6 + $0x20] sm:$0xff]
    %v389 = vld [vmem:[%s6 + $0x28] sm:$0xff]
    %v390 = vld [vmem:[%s6 + $0x30] sm:$0x3]
    %392 = vset.pattern.permute.xlu0 0
    %393 = vperm.xlu0 %392, %v384
    %v394 = vpop.permute.xlu0 %393
    %397 = vset.pattern.permute.xlu0 0
    %398 = vperm.xlu0 %397, %v385
    %v399 = vpop.permute.xlu0 %398
    %402 = vset.pattern.permute.xlu0 0
    %403 = vperm.xlu0 %402, %v386
    %v404 = vpop.permute.xlu0 %403
    %407 = vset.pattern.permute.xlu0 0
    %408 = vperm.xlu0 %407, %v387
    %v409 = vpop.permute.xlu0 %408
    %412 = vset.pattern.permute.xlu0 0
    %413 = vperm.xlu0 %412, %v388
    %v414 = vpop.permute.xlu0 %413
    %417 = vset.pattern.permute.xlu0 0
    %418 = vperm.xlu0 %417, %v389
    %v419 = vpop.permute.xlu0 %418
    %422 = vset.pattern.permute.xlu0 0
    %423 = vperm.xlu0 %422, %v390
    %v424 = vpop.permute.xlu0 %423
    %v427 = vsel %vm244, %v377, 0
    %v430 = vsel %vm244, %v378, 0
    %v433 = vsel %vm244, %v379, 0
    %v436 = vsel %vm244, %v380, 0
    %v439 = vsel %vm244, %v381, 0
    %v442 = vsel %vm244, %v382, 0
    %v445 = vsel %vm244, %v383, 0
    %v448 = vsel %vm266, %v376, 0
    %450 = vmatprep.subr.mxu0 0.0
    %451 = vmatpush1.msra.mxu0 %v370
    %452 = vmatprep.subr.mxu0 0.0
    %453 = vmatpush1.msra.mxu0 %v371
    %454 = vmatprep.subr.mxu0 0.0
    %455 = vmatpush1.msra.mxu0 %v372
    %456 = vmatprep.subr.mxu0 0.0
    %457 = vmatpush1.msra.mxu0 %v373
    %458 = vmatprep.subr.mxu0 0.0
    %459 = vmatpush1.msra.mxu0 %v374
    %460 = vmatprep.subr.mxu0 0.0
    %461 = vmatpush1.msra.mxu0 %v375
    %462 = vmatprep.subr.mxu0 0.0
    %463 = vmatpush1.msra.mxu0 %v448
    %464 = vmatprep.subr.mxu0 0.0
    %465 = vmatpush1.msra.mxu0 0.0
    %466 = vmatprep.subr.mxu0 0.0
    %467 = vmatpush1.msra.mxu0 0.0
    %468 = vmatprep.subr.mxu0 0.0
    %469 = vmatpush1.msra.mxu0 0.0
    %470 = vmatprep.subr.mxu0 0.0
    %471 = vmatpush1.msra.mxu0 0.0
    %472 = vmatprep.subr.mxu0 0.0
    %473 = vmatpush1.msra.mxu0 0.0
    %474 = vmatprep.subr.mxu0 0.0
    %475 = vmatpush1.msra.mxu0 0.0
    %476 = vmatprep.subr.mxu0 0.0
    %477 = vmatpush1.msra.mxu0 0.0
    %478 = vmatprep.subr.mxu0 0.0
    %479 = vmatpush1.msra.mxu0 0.0
    %480 = vmatprep.subr.mxu0 0.0
    %481 = vmatpush1.msra.mxu0 0.0
    %482 = vmatprep.subr.mxu0 0.0
    %483 = vmatpush1.msra.mxu0 0.0
    %484 = vmatprep.subr.mxu0 0.0
    %485 = vmatpush1.msra.mxu0 0.0
    %486 = vmatprep.subr.mxu0 0.0
    %487 = vmatpush1.msra.mxu0 0.0
    %488 = vmatprep.subr.mxu0 0.0
    %489 = vmatpush1.msra.mxu0 0.0
    %490 = vmatprep.subr.mxu0 0.0
    %491 = vmatpush1.msra.mxu0 0.0
    %492 = vmatprep.subr.mxu0 0.0
    %493 = vmatpush1.msra.mxu0 0.0
    %494 = vmatprep.subr.mxu0 0.0
    %495 = vmatpush1.msra.mxu0 0.0
    %496 = vmatprep.subr.mxu0 0.0
    %497 = vmatpush1.msra.mxu0 0.0
    %498 = vmatprep.subr.mxu0 0.0
    %499 = vmatpush1.msra.mxu0 0.0
    %500 = vmatprep.subr.mxu0 0.0
    %501 = vmatpush1.msra.mxu0 0.0
    %502 = vmatprep.subr.mxu0 0.0
    %503 = vmatpush1.msra.mxu0 0.0
    %504 = vmatprep.subr.mxu0 0.0
    %505 = vmatpush1.msra.mxu0 0.0
    %506 = vmatprep.subr.mxu0 0.0
    %507 = vmatpush1.msra.mxu0 0.0
    %508 = vmatprep.subr.mxu0 0.0
    %509 = vmatpush1.msra.mxu0 0.0
    %510 = vmatprep.subr.mxu0 0.0
    %511 = vmatpush1.msra.mxu0 0.0
    %512 = vmatprep.subr.mxu0 0.0
    %513 = vmatpush1.msra.mxu0 0.0
    %514 = vmatprep.mubr.f32.mxu0 0.0
    %515 = vmatmul.mubr.f32.gmra.mrb[0].mxu0 %v427
    %v516 = vpop.f32.mrb[0].mxu0
    %v517 = vadd.f32 %v394, %v516
    %v518 = vpop.f32.mrb[0].mxu0
    %519 = vmatprep.mubr.f32.mxu0 0.0
    %520 = vmatmul.mubr.f32.gmra.mrb[0].mxu0 %v430
    %v521 = vpop.f32.mrb[0].mxu0
    %v522 = vadd.f32 %v399, %v521
    %v523 = vpop.f32.mrb[0].mxu0
    %524 = vmatprep.mubr.f32.mxu0 0.0
    %525 = vmatmul.mubr.f32.gmra.mrb[0].mxu0 %v433
    %v526 = vpop.f32.mrb[0].mxu0
    %v527 = vadd.f32 %v404, %v526
    %v528 = vpop.f32.mrb[0].mxu0
    %529 = vmatprep.mubr.f32.mxu0 0.0
    %530 = vmatmul.mubr.f32.gmra.mrb[0].mxu0 %v436
    %v531 = vpop.f32.mrb[0].mxu0
    %v532 = vadd.f32 %v409, %v531
    %v533 = vpop.f32.mrb[0].mxu0
    %534 = vmatprep.mubr.f32.mxu0 0.0
    %535 = vmatmul.mubr.f32.gmra.mrb[0].mxu0 %v439
    %v536 = vpop.f32.mrb[0].mxu0
    %v537 = vadd.f32 %v414, %v536
    %v538 = vpop.f32.mrb[0].mxu0
    %539 = vmatprep.mubr.f32.mxu0 0.0
    %540 = vmatmul.mubr.f32.gmra.mrb[0].mxu0 %v442
    %v541 = vpop.f32.mrb[0].mxu0
    %v542 = vadd.f32 %v419, %v541
    %v543 = vpop.f32.mrb[0].mxu0
    %544 = vmatprep.mubr.f32.mxu0 0.0
    %545 = vmatmul.mubr.f32.gmra.mrb[0].mxu0 %v445
    %v546 = vpop.f32.mrb[0].mxu0
    %v547 = vadd.f32 %v424, %v546
    %v548 = vpop.f32.mrb[0].mxu0
    %549 = vdwg.mxu0
    %v550 = vtanh.pop %v517
    %v551 = vtanh.pop %v522
    %v552 = vtanh.pop %v527
    %v553 = vtanh.pop %v532
    %v554 = vtanh.pop %v537
    %v555 = vtanh.pop %v542
    %v556 = vtanh.pop %v547
    %v557 = vld [vmem:[%s7] sm:$0xff]
    %v558 = vld [vmem:[%s7 + $0x8] sm:$0xff]
    %v559 = vld [vmem:[%s7 + $0x10] sm:$0xff]
    %v560 = vld [vmem:[%s7 + $0x18] sm:$0xff]
    %v561 = vld [vmem:[%s7 + $0x20] sm:$0xff]
    %v562 = vld [vmem:[%s7 + $0x28] sm:$0xff]
    %v563 = vld [vmem:[%s7 + $0x30] sm:$0x3]
    %v564 = vld [vmem:[%s8] sm:$0xff]
    %v565 = vld [vmem:[%s8 + $0x8] sm:$0xff]
    %v566 = vld [vmem:[%s8 + $0x10] sm:$0xff]
    %v567 = vld [vmem:[%s8 + $0x18] sm:$0xff]
    %v568 = vld [vmem:[%s8 + $0x20] sm:$0xff]
    %v569 = vld [vmem:[%s8 + $0x28] sm:$0xff]
    %v570 = vld [vmem:[%s8 + $0x30] sm:$0x3]
    %572 = vset.pattern.permute.xlu0 0
    %573 = vperm.xlu0 %572, %v564
    %v574 = vpop.permute.xlu0 %573
    %577 = vset.pattern.permute.xlu0 0
    %578 = vperm.xlu0 %577, %v565
    %v579 = vpop.permute.xlu0 %578
    %582 = vset.pattern.permute.xlu0 0
    %583 = vperm.xlu0 %582, %v566
    %v584 = vpop.permute.xlu0 %583
    %587 = vset.pattern.permute.xlu0 0
    %588 = vperm.xlu0 %587, %v567
    %v589 = vpop.permute.xlu0 %588
    %592 = vset.pattern.permute.xlu0 0
    %593 = vperm.xlu0 %592, %v568
    %v594 = vpop.permute.xlu0 %593
    %597 = vset.pattern.permute.xlu0 0
    %598 = vperm.xlu0 %597, %v569
    %v599 = vpop.permute.xlu0 %598
    %602 = vset.pattern.permute.xlu0 0
    %603 = vperm.xlu0 %602, %v570
    %v604 = vpop.permute.xlu0 %603
    %v607 = vsel %vm244, %v557, 0
    %v610 = vsel %vm244, %v558, 0
    %v613 = vsel %vm244, %v559, 0
    %v616 = vsel %vm244, %v560, 0
    %v619 = vsel %vm244, %v561, 0
    %v622 = vsel %vm244, %v562, 0
    %v625 = vsel %vm244, %v563, 0
    %v628 = vsel %vm266, %v556, 0
    %630 = vmatprep.subr.mxu0 0.0
    %631 = vmatpush1.msra.mxu0 %v550
    %632 = vmatprep.subr.mxu0 0.0
    %633 = vmatpush1.msra.mxu0 %v551
    %634 = vmatprep.subr.mxu0 0.0
    %635 = vmatpush1.msra.mxu0 %v552
    %636 = vmatprep.subr.mxu0 0.0
    %637 = vmatpush1.msra.mxu0 %v553
    %638 = vmatprep.subr.mxu0 0.0
    %639 = vmatpush1.msra.mxu0 %v554
    %640 = vmatprep.subr.mxu0 0.0
    %641 = vmatpush1.msra.mxu0 %v555
    %642 = vmatprep.subr.mxu0 0.0
    %643 = vmatpush1.msra.mxu0 %v628
    %644 = vmatprep.subr.mxu0 0.0
    %645 = vmatpush1.msra.mxu0 0.0
    %646 = vmatprep.subr.mxu0 0.0
    %647 = vmatpush1.msra.mxu0 0.0
    %648 = vmatprep.subr.mxu0 0.0
    %649 = vmatpush1.msra.mxu0 0.0
    %650 = vmatprep.subr.mxu0 0.0
    %651 = vmatpush1.msra.mxu0 0.0
    %652 = vmatprep.subr.mxu0 0.0
    %653 = vmatpush1.msra.mxu0 0.0
    %654 = vmatprep.subr.mxu0 0.0
    %655 = vmatpush1.msra.mxu0 0.0
    %656 = vmatprep.subr.mxu0 0.0
    %657 = vmatpush1.msra.mxu0 0.0
    %658 = vmatprep.subr.mxu0 0.0
    %659 = vmatpush1.msra.mxu0 0.0
    %660 = vmatprep.subr.mxu0 0.0
    %661 = vmatpush1.msra.mxu0 0.0
    %662 = vmatprep.subr.mxu0 0.0
    %663 = vmatpush1.msra.mxu0 0.0
    %664 = vmatprep.subr.mxu0 0.0
    %665 = vmatpush1.msra.mxu0 0.0
    %666 = vmatprep.subr.mxu0 0.0
    %667 = vmatpush1.msra.mxu0 0.0
    %668 = vmatprep.subr.mxu0 0.0
    %669 = vmatpush1.msra.mxu0 0.0
    %670 = vmatprep.subr.mxu0 0.0
    %671 = vmatpush1.msra.mxu0 0.0
    %672 = vmatprep.subr.mxu0 0.0
    %673 = vmatpush1.msra.mxu0 0.0
    %674 = vmatprep.subr.mxu0 0.0
    %675 = vmatpush1.msra.mxu0 0.0
    %676 = vmatprep.subr.mxu0 0.0
    %677 = vmatpush1.msra.mxu0 0.0
    %678 = vmatprep.subr.mxu0 0.0
    %679 = vmatpush1.msra.mxu0 0.0
    %680 = vmatprep.subr.mxu0 0.0
    %681 = vmatpush1.msra.mxu0 0.0
    %682 = vmatprep.subr.mxu0 0.0
    %683 = vmatpush1.msra.mxu0 0.0
    %684 = vmatprep.subr.mxu0 0.0
    %685 = vmatpush1.msra.mxu0 0.0
    %686 = vmatprep.subr.mxu0 0.0
    %687 = vmatpush1.msra.mxu0 0.0
    %688 = vmatprep.subr.mxu0 0.0
    %689 = vmatpush1.msra.mxu0 0.0
    %690 = vmatprep.subr.mxu0 0.0
    %691 = vmatpush1.msra.mxu0 0.0
    %692 = vmatprep.subr.mxu0 0.0
    %693 = vmatpush1.msra.mxu0 0.0
    %694 = vmatprep.mubr.f32.mxu0 0.0
    %695 = vmatmul.mubr.f32.gmra.mrb[0].mxu0 %v607
    %v696 = vpop.f32.mrb[0].mxu0
    %v697 = vadd.f32 %v574, %v696
    %v698 = vpop.f32.mrb[0].mxu0
    %699 = vmatprep.mubr.f32.mxu0 0.0
    %700 = vmatmul.mubr.f32.gmra.mrb[0].mxu0 %v610
    %v701 = vpop.f32.mrb[0].mxu0
    %v702 = vadd.f32 %v579, %v701
    %v703 = vpop.f32.mrb[0].mxu0
    %704 = vmatprep.mubr.f32.mxu0 0.0
    %705 = vmatmul.mubr.f32.gmra.mrb[0].mxu0 %v613
    %v706 = vpop.f32.mrb[0].mxu0
    %v707 = vadd.f32 %v584, %v706
    %v708 = vpop.f32.mrb[0].mxu0
    %709 = vmatprep.mubr.f32.mxu0 0.0
    %710 = vmatmul.mubr.f32.gmra.mrb[0].mxu0 %v616
    %v711 = vpop.f32.mrb[0].mxu0
    %v712 = vadd.f32 %v589, %v711
    %v713 = vpop.f32.mrb[0].mxu0
    %714 = vmatprep.mubr.f32.mxu0 0.0
    %715 = vmatmul.mubr.f32.gmra.mrb[0].mxu0 %v619
    %v716 = vpop.f32.mrb[0].mxu0
    %v717 = vadd.f32 %v594, %v716
    %v718 = vpop.f32.mrb[0].mxu0
    %719 = vmatprep.mubr.f32.mxu0 0.0
    %720 = vmatmul.mubr.f32.gmra.mrb[0].mxu0 %v622
    %v721 = vpop.f32.mrb[0].mxu0
    %v722 = vadd.f32 %v599, %v721
    %v723 = vpop.f32.mrb[0].mxu0
    %724 = vmatprep.mubr.f32.mxu0 0.0
    %725 = vmatmul.mubr.f32.gmra.mrb[0].mxu0 %v625
    %v726 = vpop.f32.mrb[0].mxu0
    %v727 = vadd.f32 %v604, %v726
    %v728 = vpop.f32.mrb[0].mxu0
    %729 = vdwg.mxu0
    %v730 = vtanh.pop %v697
    %v731 = vtanh.pop %v702
    %v732 = vtanh.pop %v707
    %v733 = vtanh.pop %v712
    %v734 = vtanh.pop %v717
    %v735 = vtanh.pop %v722
    %v736 = vtanh.pop %v727
    %v737 = vld [vmem:[%s9] sm:$0xf]
    %v738 = vld [vmem:[%s10] sm:$0xf]
    %740 = vset.pattern.permute.xlu0 0
    %741 = vperm.xlu0 %740, %v738
    %v742 = vpop.permute.xlu0 %741
    %v745 = vsel %vm244, %v737, 0
    %v748 = vsel %vm266, %v736, 0
    %750 = vmatprep.subr.mxu0 0.0
    %751 = vmatpush1.msra.mxu0 %v730
    %752 = vmatprep.subr.mxu0 0.0
    %753 = vmatpush1.msra.mxu0 %v731
    %754 = vmatprep.subr.mxu0 0.0
    %755 = vmatpush1.msra.mxu0 %v732
    %756 = vmatprep.subr.mxu0 0.0
    %757 = vmatpush1.msra.mxu0 %v733
    %758 = vmatprep.subr.mxu0 0.0
    %759 = vmatpush1.msra.mxu0 %v734
    %760 = vmatprep.subr.mxu0 0.0
    %761 = vmatpush1.msra.mxu0 %v735
    %762 = vmatprep.subr.mxu0 0.0
    %763 = vmatpush1.msra.mxu0 %v748
    %764 = vmatprep.subr.mxu0 0.0
    %765 = vmatpush1.msra.mxu0 0.0
    %766 = vmatprep.subr.mxu0 0.0
    %767 = vmatpush1.msra.mxu0 0.0
    %768 = vmatprep.subr.mxu0 0.0
    %769 = vmatpush1.msra.mxu0 0.0
    %770 = vmatprep.subr.mxu0 0.0
    %771 = vmatpush1.msra.mxu0 0.0
    %772 = vmatprep.subr.mxu0 0.0
    %773 = vmatpush1.msra.mxu0 0.0
    %774 = vmatprep.subr.mxu0 0.0
    %775 = vmatpush1.msra.mxu0 0.0
    %776 = vmatprep.subr.mxu0 0.0
    %777 = vmatpush1.msra.mxu0 0.0
    %778 = vmatprep.subr.mxu0 0.0
    %779 = vmatpush1.msra.mxu0 0.0
    %780 = vmatprep.subr.mxu0 0.0
    %781 = vmatpush1.msra.mxu0 0.0
    %782 = vmatprep.subr.mxu0 0.0
    %783 = vmatpush1.msra.mxu0 0.0
    %784 = vmatprep.subr.mxu0 0.0
    %785 = vmatpush1.msra.mxu0 0.0
    %786 = vmatprep.subr.mxu0 0.0
    %787 = vmatpush1.msra.mxu0 0.0
    %788 = vmatprep.subr.mxu0 0.0
    %789 = vmatpush1.msra.mxu0 0.0
    %790 = vmatprep.subr.mxu0 0.0
    %791 = vmatpush1.msra.mxu0 0.0
    %792 = vmatprep.subr.mxu0 0.0
    %793 = vmatpush1.msra.mxu0 0.0
    %794 = vmatprep.subr.mxu0 0.0
    %795 = vmatpush1.msra.mxu0 0.0
    %796 = vmatprep.subr.mxu0 0.0
    %797 = vmatpush1.msra.mxu0 0.0
    %798 = vmatprep.subr.mxu0 0.0
    %799 = vmatpush1.msra.mxu0 0.0
    %800 = vmatprep.subr.mxu0 0.0
    %801 = vmatpush1.msra.mxu0 0.0
    %802 = vmatprep.subr.mxu0 0.0
    %803 = vmatpush1.msra.mxu0 0.0
    %804 = vmatprep.subr.mxu0 0.0
    %805 = vmatpush1.msra.mxu0 0.0
    %806 = vmatprep.subr.mxu0 0.0
    %807 = vmatpush1.msra.mxu0 0.0
    %808 = vmatprep.subr.mxu0 0.0
    %809 = vmatpush1.msra.mxu0 0.0
    %810 = vmatprep.subr.mxu0 0.0
    %811 = vmatpush1.msra.mxu0 0.0
    %812 = vmatprep.subr.mxu0 0.0
    %813 = vmatpush1.msra.mxu0 0.0
    %814 = vmatprep.mubr.f32.mxu0 0.0
    %815 = vmatmul.mubr.f32.gmra.mrb[0].mxu0 %v745
    %v816 = vpop.f32.mrb[0].mxu0
    %v817 = vadd.f32 %v742, %v816
    %v818 = vpop.f32.mrb[0].mxu0
    %819 = vdwg.mxu0
    %v820 = vmul.f32 %v817, 1.442695
    %v821 = vpow.pop %v820
    %822 = vst [vmem:[#allocation2] sm:$0x3] %v821
    %823 = vst [vmem:[#allocation2] sm:$0x4] %v817
    %v824 = vtanh.pop %v817
    %v825 = vmul.f32 %v824, 1.5707964
    %826 = vst [vmem:[#allocation2] sm:$0x8] %v825
    // Predicated region
    $region46: #{tpu_custom_call.1} parent=1 // pred_check
      _
    $region47: #{tpu_custom_call.1} parent=1 // pred_check_branch
      %828 = sbr.rel (0) target = $region49
    $region48: #{tpu_custom_call.1} parent=1 // pred_region
      %s830 = ssub.s32 64, 64
      %831 = vsyncadd [#allocation3], %s830
      %s833 = sshll.u32 [#allocation2], 4
      %s834 = int_to_ptr.vmem [resolvable:$true] %s833
      %836 = dma.vmem_to_hbm [thread:$0]  %s834, 64, %s11, [#allocation3]
    $region49: #{tpu_custom_call.1} parent=1 // pred_fallthru
      _
    // Predicated region
    $region50: #{tpu_custom_call.1} parent=1 // pred_check
      _
    $region51: #{tpu_custom_call.1} parent=1 // pred_check_branch
      %838 = sbr.rel (0) target = $region53
    $region52: #{tpu_custom_call.1} parent=1 // pred_region
      %839 = dma.done [#allocation3], 64
    $region53: #{tpu_custom_call.1} parent=1 // pred_fallthru
      _
    %840 = vsyncpa [#allocation3], 1

</llo_original>
